<compile_context>
chip_gen: v7x
topology: tpu7x:2x2x1
jax: 0.10.0
libtpu: 0.0.40
codegen_flags: <defaults>
</compile_context>

<pallas_src>
import numpy as np
import jax
import jax.numpy as jnp
from jax import lax
from jax.experimental import pallas as pl
from jax.experimental.pallas import tpu as pltpu

DIMS_N = 2  # kernel is specialized to bivariate splines


def _round_up(x, m):
    return ((x + m - 1) // m) * m


def prepare_control_grid(control_pts):
    """One-time pad + flatten of the control grid (hoist out of per-call path).

    control_pts: [C, S0, S1] -> (g2 [C*S0r, S1pad] f32, (C, S0r, S1pad)).
    S0 is rounded up to 8 (sublanes), S1 to 128 (lanes = matmul K). Padded
    entries are zero and are never selected by the weight scatter.
    """
    C, S0, S1 = control_pts.shape
    S0r = _round_up(S0, 8)
    S1pad = _round_up(S1, 128)
    g = jnp.asarray(control_pts, jnp.float32)
    g = jnp.pad(g, ((0, 0), (0, S0r - S0), (0, S1pad - S1)))
    return g.reshape(C * S0r, S1pad), (C, S0r, S1pad)


def _make_kernel(C, S0r, S1pad, TP, padding_value):
    def kernel(params_ref, pts_ref, g_ref, out_ref):
        # params_ref (SMEM f32[8]): [o0, o1, inv_s0, inv_s1, maxc0, maxc1, 0, 0]
        pts = pts_ref[...]                                      # [2, TP] lane-dense
        x0 = (pts[0:1, :] - params_ref[0]) * params_ref[2]      # [1, TP]
        x1 = (pts[1:2, :] - params_ref[1]) * params_ref[3]      # [1, TP]
        in_b = jnp.logical_and(
            jnp.logical_and(x0 >= 1.0, x0 < params_ref[4]),
            jnp.logical_and(x1 >= 1.0, x1 < params_ref[5]))     # [1, TP] bool
        one = jnp.float32(1.0)
        x0 = jnp.where(in_b, x0, one)
        x1 = jnp.where(in_b, x1, one)
        i0f = jnp.floor(x0)                                     # floor == trunc (x >= 1)
        i1f = jnp.floor(x1)
        f0 = x0 - i0f
        f1 = x1 - i1f
        i0 = i0f.astype(jnp.int32)
        i1 = i1f.astype(jnp.int32)

        def basis(f):  # exact _coefs_inplace formulas, on cheap [1, TP] rows
            sixth = jnp.float32(1.0 / 6.0)
            omx = 1.0 - f
            c0 = omx * omx * omx
            c1 = 3.0 * (f - 2.0) * (f * f) + 4.0
            c2 = 4.0 - 3.0 * (omx * omx) * (f + 1.0)
            c3 = f * f * f
            return (c0 * sixth, c1 * sixth, c2 * sixth, c3 * sixth)

        b0 = basis(f0)  # weight k belongs to control index i + (k - 1)
        b1 = basis(f1)

        zero = jnp.float32(0.0)

        def dense_weights(rows, i, coefs):
            # W[r, p] = coefs[k][p] where r == i[p] + (k - 1), else 0.
            # Hoisted int32 iota + subtract, then a nested select chain
            # (no adds) to minimize VALU ops in the dominant [rows, TP] build.
            sub = lax.broadcasted_iota(jnp.int32, (rows, TP), 0)
            d = sub - i                                         # [rows, TP]
            return jnp.where(d == -1, coefs[0],
                   jnp.where(d == 0, coefs[1],
                   jnp.where(d == 1, coefs[2],
                   jnp.where(d == 2, coefs[3], zero))))

        w1 = dense_weights(S1pad, i1, b1)                       # [S1pad, TP]
        w0 = dense_weights(S0r, i0, b0)                         # [S0r, TP]

        # One wide MXU matmul over all channels at once (contraction over b).
        tmp = jnp.dot(g_ref[...], w1,
                      preferred_element_type=jnp.float32)       # [C*S0r, TP]

        # Contraction over a: tile-aligned reshape (S0r % 8 == 0, TP % 128 == 0)
        # + fused multiply + sublane reduce. No per-channel Python loop/concat.
        tmp3 = tmp.reshape(C, S0r, TP)
        vals = jnp.sum(tmp3 * w0[None, :, :], axis=1)           # [C, TP]

        out_ref[...] = jnp.where(in_b, vals, jnp.float32(padding_value))
    return kernel


def cubic_bspline_forward(pts, control_pts, origin, step, max_interp_grid_coord,
                          padding_value=0.0, tile_pts=512, packed_grid=None):
    """pts: [**, 2] f32, control_pts: [C, S0, S1] f32 -> [**, C] f32.

    packed_grid: optional result of prepare_control_grid(control_pts), so the
    grid pad/reshape is not re-done on every call.
    """
    if packed_grid is None:
        packed_grid = prepare_control_grid(control_pts)
    g2, (C, S0r, S1pad) = packed_grid

    prefix = pts.shape[:-1]
    P = int(np.prod(prefix)) if prefix else 1
    pts_flat = jnp.asarray(pts, jnp.float32).reshape(P, DIMS_N)

    # Points tile: multiple of 256 lanes, clamped so tiny inputs don't pay for
    # a mostly-padding tile.
    TP = max(256, _round_up(int(tile_pts), 256))
    TP = min(TP, _round_up(max(P, 1), 256))
    P_pad = _round_up(max(P, 1), TP)
    if P_pad != P:
        pts_flat = jnp.pad(pts_flat, ((0, P_pad - P), (0, 0)))
    pts_t = pts_flat.T                                          # [2, P_pad] lane-dense

    # Pack all scalar parameters into one small SMEM array; precompute 1/step
    # so the kernel multiplies instead of dividing.
    origin = jnp.asarray(origin, jnp.float32).reshape(DIMS_N)
    step = jnp.asarray(step, jnp.float32).reshape(DIMS_N)
    maxc = jnp.asarray(max_interp_grid_coord, jnp.float32).reshape(DIMS_N)
    params = jnp.concatenate(
        [origin, 1.0 / step, maxc, jnp.zeros((2,), jnp.float32)])   # f32[8]

    kernel = _make_kernel(C, S0r, S1pad, TP, float(padding_value))

    # VMEM budget: single-buffered grid + double-buffered point/output tiles
    # + kernel working set (w1, w0, tmp, vals). Clamped to a range that is safe
    # on v5e/v6e (128 MiB physical) and v7x (64 MiB physical).
    grid_bytes = C * S0r * S1pad * 4
    tile_io_bytes = (DIMS_N * TP + C * TP) * 4 * 2
    work_bytes = (S1pad + S0r + C * S0r + 4 * C) * TP * 4
    vmem_limit = int(min(48 * 1024 * 1024,
                         max(32 * 1024 * 1024,
                             grid_bytes + tile_io_bytes + work_bytes + (4 << 20))))

    out = pl.pallas_call(
        kernel,
        out_shape=jax.ShapeDtypeStruct((C, P_pad), jnp.float32),
        grid_spec=pltpu.PrefetchScalarGridSpec(
            num_scalar_prefetch=0,
            grid=(P_pad // TP,),
            in_specs=[
                pl.BlockSpec(memory_space=pltpu.MemorySpace.SMEM),   # packed scalars
                pl.BlockSpec((DIMS_N, TP), lambda i: (0, i)),        # points tile (lane-dense)
                pl.BlockSpec((C * S0r, S1pad), lambda i: (0, 0),     # full control grid,
                             pipeline_mode=pl.Buffered(1)),          # DMA'd once -> 1 buffer
            ],
            out_specs=pl.BlockSpec((C, TP), lambda i: (0, i)),       # lane-dense output
        ),
        compiler_params=pltpu.CompilerParams(
            dimension_semantics=("parallel",),
            vmem_limit_bytes=vmem_limit),
    )(params, pts_t, g2)

    # Module semantics require [**, C]; the transpose is one extra XLA pass.
    # Downstream consumers that can take channel-major [C, P] should use `out`
    # directly to avoid it.
    out = out.T[:P]                                              # [P, C]
    return out.reshape(*prefix, C)


def make_spline_params(min_pt, max_pt, step, channels_n, eps=1e-8, key=None):
    """Mimics CubicBSpline.__init__ (control_pts initialized randomly here)."""
    min_pt = np.asarray(min_pt, np.float32)
    max_pt = np.asarray(max_pt, np.float32)
    step = np.asarray(step, np.float32)
    origin = min_pt - step * (1.0 + eps)
    control_grid_size = np.ceil((max_pt - origin) / step + (2.0 + eps)).astype(np.int64)
    max_interp_grid_coord = control_grid_size - 2
    shape = [channels_n] + control_grid_size.tolist()
    control_pts = jax.random.normal(key, shape, jnp.float32)
    return origin, step, max_interp_grid_coord.astype(np.float32), control_pts


def _reference(pts, control_pts, origin, step, maxc, padding_value=0.0):
    """Plain-JAX reference (mirrors the PyTorch forward) for validation."""
    origin = jnp.asarray(origin, jnp.float32)
    step = jnp.asarray(step, jnp.float32)
    maxc = jnp.asarray(maxc, jnp.float32)
    G = jnp.asarray(control_pts, jnp.float32)
    offs = jnp.arange(-1, 3)

    def basis1(t):
        omx = 1.0 - t
        return jnp.stack([omx ** 3,
                          3.0 * (t - 2.0) * t * t + 4.0,
                          4.0 - 3.0 * omx * omx * (t + 1.0),
                          t ** 3]) / 6.0

    def one(pt):
        x = (pt - origin) / step
        in_b = jnp.logical_and(jnp.all(x >= 1.0), jnp.all(x < maxc))
        x = jnp.where(in_b, x, 1.0)
        xi = jnp.floor(x).astype(jnp.int32)
        f = x - xi
        b0 = basis1(f[0])
        b1 = basis1(f[1])
        patch = G[:, xi[0] + offs[:, None], xi[1] + offs[None, :]]   # [C, 4, 4]
        v = jnp.einsum('cab,a,b->c', patch, b0, b1)
        return jnp.where(in_b, v, jnp.float32(padding_value))

    prefix = pts.shape[:-1]
    flat = jnp.asarray(pts, jnp.float32).reshape(-1, DIMS_N)
    vals = jax.vmap(one)(flat)
    return vals.reshape(*prefix, G.shape[0])


if __name__ == "__main__":
    key = jax.random.PRNGKey(0)
    k_ctrl, k_pts = jax.random.split(key)

    channels_n = 4
    min_pt = [0.0, 0.0]
    max_pt = [10.0, 12.0]
    step = [1.0, 1.0]

    origin, step_arr, max_interp, control_pts = make_spline_params(
        min_pt, max_pt, step, channels_n, eps=1e-8, key=k_ctrl)

    # query points: [2, 16, 2]; range chosen so some points fall out of bounds
    pts = jax.random.uniform(k_pts, (2, 16, DIMS_N),
                             minval=-2.0, maxval=14.0, dtype=jnp.float32)

    packed = prepare_control_grid(control_pts)   # one-time pad/reshape, hoisted
    out = cubic_bspline_forward(pts, control_pts, origin, step_arr, max_interp,
                                padding_value=0.0, packed_grid=packed)
    out = jax.block_until_ready(out)

    ref = jax.block_until_ready(
        _reference(pts, control_pts, origin, step_arr, max_interp, padding_value=0.0))

    np.testing.assert_allclose(np.asarray(out), np.asarray(ref), rtol=1e-4, atol=1e-4)
    assert out.shape == (2, 16, channels_n)
    print("KERNEL_OK")
</pallas_src>

<mosaic_0001>
module attributes {stable_mosaic.version = 11 : i64} {
  func.func @kernel(%arg0: i32, %arg1: memref<8xf32, #tpu.memory_space<smem>>, %arg2: memref<2x256xf32, #tpu.memory_space<vmem>>, %arg3: memref<64x128xf32, #tpu.memory_space<vmem>>, %arg4: memref<4x256xf32, #tpu.memory_space<vmem>>) attributes {dimension_semantics = [#tpu.dimension_semantics<parallel>], iteration_bounds = array<i64: 1>, scalar_prefetch = 0 : i64, scratch_operands = 0 : i64, tpu.core_type = #tpu.core_type<tc>, window_params = [{transform_indices = @transform_0, window_bounds = array<i64: 8>}, {transform_indices = @transform_1, window_bounds = array<i64: 2, 256>}, {pipeline_mode = #tpu.pipeline_mode<synchronous>, transform_indices = @transform_2, window_bounds = array<i64: 64, 128>}, {transform_indices = @transform_3, window_bounds = array<i64: 4, 256>}]} {
    %c0 = arith.constant 0 : index
    %c0_0 = arith.constant 0 : index
    %0 = vector.load %arg2[%c0, %c0_0] : memref<2x256xf32, #tpu.memory_space<vmem>>, vector<2x256xf32>
    %1 = vector.extract_strided_slice %0 {offsets = [0, 0], sizes = [1, 256], strides = [1, 1]} : vector<2x256xf32> to vector<1x256xf32>
    %c0_1 = arith.constant 0 : index
    %2 = memref.load %arg1[%c0_1] : memref<8xf32, #tpu.memory_space<smem>>
    %3 = vector.broadcast %2 : f32 to vector<1x256xf32>
    %4 = arith.subf %1, %3 : vector<1x256xf32>
    %c2 = arith.constant 2 : index
    %5 = memref.load %arg1[%c2] : memref<8xf32, #tpu.memory_space<smem>>
    %6 = vector.broadcast %5 : f32 to vector<1x256xf32>
    %7 = arith.mulf %4, %6 : vector<1x256xf32>
    %8 = vector.extract_strided_slice %0 {offsets = [1, 0], sizes = [1, 256], strides = [1, 1]} : vector<2x256xf32> to vector<1x256xf32>
    %c1 = arith.constant 1 : index
    %9 = memref.load %arg1[%c1] : memref<8xf32, #tpu.memory_space<smem>>
    %10 = vector.broadcast %9 : f32 to vector<1x256xf32>
    %11 = arith.subf %8, %10 : vector<1x256xf32>
    %c3 = arith.constant 3 : index
    %12 = memref.load %arg1[%c3] : memref<8xf32, #tpu.memory_space<smem>>
    %13 = vector.broadcast %12 : f32 to vector<1x256xf32>
    %14 = arith.mulf %11, %13 : vector<1x256xf32>
    %cst = arith.constant 1.000000e+00 : f32
    %15 = vector.broadcast %cst : f32 to vector<1x256xf32>
    %16 = arith.cmpf oge, %7, %15 : vector<1x256xf32>
    %c4 = arith.constant 4 : index
    %17 = memref.load %arg1[%c4] : memref<8xf32, #tpu.memory_space<smem>>
    %18 = vector.broadcast %17 : f32 to vector<1x256xf32>
    %19 = arith.cmpf olt, %7, %18 : vector<1x256xf32>
    %20 = arith.andi %16, %19 : vector<1x256xi1>
    %cst_2 = arith.constant 1.000000e+00 : f32
    %21 = vector.broadcast %cst_2 : f32 to vector<1x256xf32>
    %22 = arith.cmpf oge, %14, %21 : vector<1x256xf32>
    %c5 = arith.constant 5 : index
    %23 = memref.load %arg1[%c5] : memref<8xf32, #tpu.memory_space<smem>>
    %24 = vector.broadcast %23 : f32 to vector<1x256xf32>
    %25 = arith.cmpf olt, %14, %24 : vector<1x256xf32>
    %26 = arith.andi %22, %25 : vector<1x256xi1>
    %27 = arith.andi %20, %26 : vector<1x256xi1>
    %cst_3 = arith.constant 1.000000e+00 : f32
    %28 = vector.broadcast %cst_3 : f32 to vector<1x256xf32>
    %29 = arith.select %27, %7, %28 : vector<1x256xi1>, vector<1x256xf32>
    %cst_4 = arith.constant 1.000000e+00 : f32
    %30 = vector.broadcast %cst_4 : f32 to vector<1x256xf32>
    %31 = arith.select %27, %14, %30 : vector<1x256xi1>, vector<1x256xf32>
    %32 = math.floor %29 : vector<1x256xf32>
    %33 = math.floor %31 : vector<1x256xf32>
    %34 = arith.subf %29, %32 : vector<1x256xf32>
    %35 = arith.subf %31, %33 : vector<1x256xf32>
    %36 = arith.fptosi %32 : vector<1x256xf32> to vector<1x256xi32>
    %37 = arith.fptosi %33 : vector<1x256xf32> to vector<1x256xi32>
    %cst_5 = arith.constant 1.000000e+00 : f32
    %38 = vector.broadcast %cst_5 : f32 to vector<1x256xf32>
    %39 = arith.subf %38, %34 : vector<1x256xf32>
    %40 = arith.mulf %39, %39 : vector<1x256xf32>
    %41 = arith.mulf %40, %39 : vector<1x256xf32>
    %cst_6 = arith.constant 2.000000e+00 : f32
    %42 = vector.broadcast %cst_6 : f32 to vector<1x256xf32>
    %43 = arith.subf %34, %42 : vector<1x256xf32>
    %cst_7 = arith.constant 3.000000e+00 : f32
    %44 = vector.broadcast %cst_7 : f32 to vector<1x256xf32>
    %45 = arith.mulf %44, %43 : vector<1x256xf32>
    %46 = arith.mulf %34, %34 : vector<1x256xf32>
    %47 = arith.mulf %45, %46 : vector<1x256xf32>
    %cst_8 = arith.constant 4.000000e+00 : f32
    %48 = vector.broadcast %cst_8 : f32 to vector<1x256xf32>
    %49 = arith.addf %47, %48 : vector<1x256xf32>
    %50 = arith.mulf %39, %39 : vector<1x256xf32>
    %cst_9 = arith.constant 3.000000e+00 : f32
    %51 = vector.broadcast %cst_9 : f32 to vector<1x256xf32>
    %52 = arith.mulf %51, %50 : vector<1x256xf32>
    %cst_10 = arith.constant 1.000000e+00 : f32
    %53 = vector.broadcast %cst_10 : f32 to vector<1x256xf32>
    %54 = arith.addf %34, %53 : vector<1x256xf32>
    %55 = arith.mulf %52, %54 : vector<1x256xf32>
    %cst_11 = arith.constant 4.000000e+00 : f32
    %56 = vector.broadcast %cst_11 : f32 to vector<1x256xf32>
    %57 = arith.subf %56, %55 : vector<1x256xf32>
    %58 = arith.mulf %34, %34 : vector<1x256xf32>
    %59 = arith.mulf %58, %34 : vector<1x256xf32>
    %cst_12 = arith.constant 0.166666672 : f32
    %60 = vector.broadcast %cst_12 : f32 to vector<1x256xf32>
    %61 = arith.mulf %41, %60 : vector<1x256xf32>
    %cst_13 = arith.constant 0.166666672 : f32
    %62 = vector.broadcast %cst_13 : f32 to vector<1x256xf32>
    %63 = arith.mulf %49, %62 : vector<1x256xf32>
    %cst_14 = arith.constant 0.166666672 : f32
    %64 = vector.broadcast %cst_14 : f32 to vector<1x256xf32>
    %65 = arith.mulf %57, %64 : vector<1x256xf32>
    %cst_15 = arith.constant 0.166666672 : f32
    %66 = vector.broadcast %cst_15 : f32 to vector<1x256xf32>
    %67 = arith.mulf %59, %66 : vector<1x256xf32>
    %cst_16 = arith.constant 1.000000e+00 : f32
    %68 = vector.broadcast %cst_16 : f32 to vector<1x256xf32>
    %69 = arith.subf %68, %35 : vector<1x256xf32>
    %70 = arith.mulf %69, %69 : vector<1x256xf32>
    %71 = arith.mulf %70, %69 : vector<1x256xf32>
    %cst_17 = arith.constant 2.000000e+00 : f32
    %72 = vector.broadcast %cst_17 : f32 to vector<1x256xf32>
    %73 = arith.subf %35, %72 : vector<1x256xf32>
    %cst_18 = arith.constant 3.000000e+00 : f32
    %74 = vector.broadcast %cst_18 : f32 to vector<1x256xf32>
    %75 = arith.mulf %74, %73 : vector<1x256xf32>
    %76 = arith.mulf %35, %35 : vector<1x256xf32>
    %77 = arith.mulf %75, %76 : vector<1x256xf32>
    %cst_19 = arith.constant 4.000000e+00 : f32
    %78 = vector.broadcast %cst_19 : f32 to vector<1x256xf32>
    %79 = arith.addf %77, %78 : vector<1x256xf32>
    %80 = arith.mulf %69, %69 : vector<1x256xf32>
    %cst_20 = arith.constant 3.000000e+00 : f32
    %81 = vector.broadcast %cst_20 : f32 to vector<1x256xf32>
    %82 = arith.mulf %81, %80 : vector<1x256xf32>
    %cst_21 = arith.constant 1.000000e+00 : f32
    %83 = vector.broadcast %cst_21 : f32 to vector<1x256xf32>
    %84 = arith.addf %35, %83 : vector<1x256xf32>
    %85 = arith.mulf %82, %84 : vector<1x256xf32>
    %cst_22 = arith.constant 4.000000e+00 : f32
    %86 = vector.broadcast %cst_22 : f32 to vector<1x256xf32>
    %87 = arith.subf %86, %85 : vector<1x256xf32>
    %88 = arith.mulf %35, %35 : vector<1x256xf32>
    %89 = arith.mulf %88, %35 : vector<1x256xf32>
    %cst_23 = arith.constant 0.166666672 : f32
    %90 = vector.broadcast %cst_23 : f32 to vector<1x256xf32>
    %91 = arith.mulf %71, %90 : vector<1x256xf32>
    %cst_24 = arith.constant 0.166666672 : f32
    %92 = vector.broadcast %cst_24 : f32 to vector<1x256xf32>
    %93 = arith.mulf %79, %92 : vector<1x256xf32>
    %cst_25 = arith.constant 0.166666672 : f32
    %94 = vector.broadcast %cst_25 : f32 to vector<1x256xf32>
    %95 = arith.mulf %87, %94 : vector<1x256xf32>
    %cst_26 = arith.constant 0.166666672 : f32
    %96 = vector.broadcast %cst_26 : f32 to vector<1x256xf32>
    %97 = arith.mulf %89, %96 : vector<1x256xf32>
    %98 = tpu.iota {dimensions = array<i32: 0>} : vector<128x256xi32>
    %99 = vector.broadcast %37 : vector<1x256xi32> to vector<128x256xi32>
    %100 = arith.subi %98, %99 : vector<128x256xi32>
    %c-1_i32 = arith.constant -1 : i32
    %101 = vector.broadcast %c-1_i32 : i32 to vector<128x256xi32>
    %102 = arith.cmpi eq, %100, %101 : vector<128x256xi32>
    %c0_i32 = arith.constant 0 : i32
    %103 = vector.broadcast %c0_i32 : i32 to vector<128x256xi32>
    %104 = arith.cmpi eq, %100, %103 : vector<128x256xi32>
    %c1_i32 = arith.constant 1 : i32
    %105 = vector.broadcast %c1_i32 : i32 to vector<128x256xi32>
    %106 = arith.cmpi eq, %100, %105 : vector<128x256xi32>
    %c2_i32 = arith.constant 2 : i32
    %107 = vector.broadcast %c2_i32 : i32 to vector<128x256xi32>
    %108 = arith.cmpi eq, %100, %107 : vector<128x256xi32>
    %cst_27 = arith.constant 0.000000e+00 : f32
    %109 = vector.shape_cast %97 : vector<1x256xf32> to vector<1x256xf32>
    %110 = vector.broadcast %109 : vector<1x256xf32> to vector<128x256xf32>
    %111 = vector.broadcast %cst_27 : f32 to vector<128x256xf32>
    %112 = arith.select %108, %110, %111 : vector<128x256xi1>, vector<128x256xf32>
    %113 = vector.shape_cast %95 : vector<1x256xf32> to vector<1x256xf32>
    %114 = vector.broadcast %113 : vector<1x256xf32> to vector<128x256xf32>
    %115 = arith.select %106, %114, %112 : vector<128x256xi1>, vector<128x256xf32>
    %116 = vector.shape_cast %93 : vector<1x256xf32> to vector<1x256xf32>
    %117 = vector.broadcast %116 : vector<1x256xf32> to vector<128x256xf32>
    %118 = arith.select %104, %117, %115 : vector<128x256xi1>, vector<128x256xf32>
    %119 = vector.shape_cast %91 : vector<1x256xf32> to vector<1x256xf32>
    %120 = vector.broadcast %119 : vector<1x256xf32> to vector<128x256xf32>
    %121 = arith.select %102, %120, %118 : vector<128x256xi1>, vector<128x256xf32>
    %122 = tpu.iota {dimensions = array<i32: 0>} : vector<16x256xi32>
    %123 = vector.broadcast %36 : vector<1x256xi32> to vector<16x256xi32>
    %124 = arith.subi %122, %123 : vector<16x256xi32>
    %c-1_i32_28 = arith.constant -1 : i32
    %125 = vector.broadcast %c-1_i32_28 : i32 to vector<16x256xi32>
    %126 = arith.cmpi eq, %124, %125 : vector<16x256xi32>
    %c0_i32_29 = arith.constant 0 : i32
    %127 = vector.broadcast %c0_i32_29 : i32 to vector<16x256xi32>
    %128 = arith.cmpi eq, %124, %127 : vector<16x256xi32>
    %c1_i32_30 = arith.constant 1 : i32
    %129 = vector.broadcast %c1_i32_30 : i32 to vector<16x256xi32>
    %130 = arith.cmpi eq, %124, %129 : vector<16x256xi32>
    %c2_i32_31 = arith.constant 2 : i32
    %131 = vector.broadcast %c2_i32_31 : i32 to vector<16x256xi32>
    %132 = arith.cmpi eq, %124, %131 : vector<16x256xi32>
    %cst_32 = arith.constant 0.000000e+00 : f32
    %133 = vector.shape_cast %67 : vector<1x256xf32> to vector<1x256xf32>
    %134 = vector.broadcast %133 : vector<1x256xf32> to vector<16x256xf32>
    %135 = vector.broadcast %cst_32 : f32 to vector<16x256xf32>
    %136 = arith.select %132, %134, %135 : vector<16x256xi1>, vector<16x256xf32>
    %137 = vector.shape_cast %65 : vector<1x256xf32> to vector<1x256xf32>
    %138 = vector.broadcast %137 : vector<1x256xf32> to vector<16x256xf32>
    %139 = arith.select %130, %138, %136 : vector<16x256xi1>, vector<16x256xf32>
    %140 = vector.shape_cast %63 : vector<1x256xf32> to vector<1x256xf32>
    %141 = vector.broadcast %140 : vector<1x256xf32> to vector<16x256xf32>
    %142 = arith.select %128, %141, %139 : vector<16x256xi1>, vector<16x256xf32>
    %143 = vector.shape_cast %61 : vector<1x256xf32> to vector<1x256xf32>
    %144 = vector.broadcast %143 : vector<1x256xf32> to vector<16x256xf32>
    %145 = arith.select %126, %144, %142 : vector<16x256xi1>, vector<16x256xf32>
    %c0_33 = arith.constant 0 : index
    %c0_34 = arith.constant 0 : index
    %146 = vector.load %arg3[%c0_33, %c0_34] : memref<64x128xf32, #tpu.memory_space<vmem>>, vector<64x128xf32>
    %cst_35 = arith.constant dense<0.000000e+00> : vector<64x256xf32>
    %147 = tpu.matmul %146, %121, %cst_35 {dimension_numbers = #tpu.dot_dimension_numbers<[1], [0], [0], [1], [0, 0, 1, 1], [], []>} : vector<64x128xf32>, vector<128x256xf32>, vector<64x256xf32> -> vector<64x256xf32>
    %148 = vector.shape_cast %147 : vector<64x256xf32> to vector<4x16x256xf32>
    %149 = vector.shape_cast %145 : vector<16x256xf32> to vector<1x16x256xf32>
    %150 = vector.broadcast %149 : vector<1x16x256xf32> to vector<4x16x256xf32>
    %151 = arith.mulf %148, %150 : vector<4x16x256xf32>
    %cst_36 = arith.constant dense<0.000000e+00> : vector<4x256xf32>
    %152 = vector.multi_reduction <add>, %151, %cst_36 [1] : vector<4x16x256xf32> to vector<4x256xf32>
    %cst_37 = arith.constant 0.000000e+00 : f32
    %153 = vector.shape_cast %27 : vector<1x256xi1> to vector<1x256xi1>
    %154 = vector.broadcast %153 : vector<1x256xi1> to vector<4x256xi1>
    %155 = vector.broadcast %cst_37 : f32 to vector<4x256xf32>
    %156 = arith.select %154, %152, %155 : vector<4x256xi1>, vector<4x256xf32>
    %c0_38 = arith.constant 0 : index
    %c0_39 = arith.constant 0 : index
    %157 = vector.load %arg4[%c0_38, %c0_39] : memref<4x256xf32, #tpu.memory_space<vmem>>, vector<4x256xf32>
    tpu.vector_store %arg4[%c0_38, %c0_39], %156 {strides = array<i32>} : memref<4x256xf32, #tpu.memory_space<vmem>>, vector<4x256xf32>,
    return
  }
  func.func @transform_0(%arg0: i32) -> i32 {
    %c0_i32 = arith.constant 0 : i32
    %c0_i32_0 = arith.constant 0 : i32
    return %c0_i32 : i32
  }
  func.func @transform_1(%arg0: i32) -> (i32, i32) {
    %c0_i32 = arith.constant 0 : i32
    %c0_i32_0 = arith.constant 0 : i32
    return %c0_i32, %arg0 : i32, i32
  }
  func.func @transform_2(%arg0: i32) -> (i32, i32) {
    %c0_i32 = arith.constant 0 : i32
    %c0_i32_0 = arith.constant 0 : i32
    %c0_i32_1 = arith.constant 0 : i32
    return %c0_i32, %c0_i32_0 : i32, i32
  }
  func.func @transform_3(%arg0: i32) -> (i32, i32) {
    %c0_i32 = arith.constant 0 : i32
    %c0_i32_0 = arith.constant 0 : i32
    return %c0_i32, %arg0 : i32, i32
  }
}

</mosaic_0001>

<llo_original>
// kernel: tpu_custom_call.1
$region0: #{tpu_custom_call.1}
  #allocation0 [shape = 'u32[]', space=smem, size = 0x4, offset = 0x4, fixed_abs, tag = 'smem constant byte address 0x4 - core index']
  #allocation1 [shape = 'u32[144,128]{1,0:T(1,128)}', space=vmem, size = 0x12000, scoped, tag = 'internal scratch']
  %s0 = inlined_call_operand.hbm [shape: f32[8], index: 0, kind: input, shape index: {}]
  %s1 = inlined_call_operand.hbm [shape: f32[2,256], index: 1, kind: input, shape index: {}]
  %s2 = inlined_call_operand.hbm [shape: f32[64,128], index: 2, kind: input, shape index: {}]
  %s3 = inlined_call_operand.hbm [shape: f32[4,256], index: 3, kind: output, shape index: {}]
  %s4 = sld [smem:[#allocation0]]
  $region34: #{tpu_custom_call.1} parent=0
    _
  %s6 = ssub.s32 1, %s4
  %s7 = scalar_select 0, %s6, %s4
  $region1: #{tpu_custom_call.1} parent=0
    #allocation2 [shape = 'u8[512]{0}', space=smem, size = 0x200, scoped, tag = 'input window, operand 0, single buffered']
    #allocation3 [shape = 's32[1]{0}', space=sflag, size = 0x4, scoped, tag = 'scoped memory for tpu_custom_call.1']
    #allocation4 [shape = 's32[1]{0}', space=sflag, size = 0x4, scoped, tag = 'scoped memory for tpu_custom_call.1']
    #allocation5 [shape = 's32[1]{0}', space=sflag, size = 0x4, scoped, tag = 'scoped memory for tpu_custom_call.1']
    #allocation6 [shape = 'u8[2048]{0}', space=vmem, size = 0x800, scoped, tag = 'input window, operand 1, single buffered']
    #allocation7 [shape = 'u8[32768]{0}', space=vmem, size = 0x8000, scoped, tag = 'input window, operand 2, single buffered']
    #allocation8 [shape = 's32[1]{0}', space=sflag, size = 0x4, scoped, tag = 'scoped memory for tpu_custom_call.1']
    #allocation9 [shape = 'u8[4096]{0}', space=vmem, size = 0x1000, scoped, tag = 'output window, operand 0, single buffered']
    %8 = vsyncpa [#allocation5], 0
    %9 = vsyncpa [#allocation3], 0
    %10 = vsyncpa [#allocation8], 0
    %11 = vsyncpa [#allocation4], 0
    // Predicated region
    $region2: #{tpu_custom_call.1} parent=1 // pred_check
      _
    $region3: #{tpu_custom_call.1} parent=1 // pred_check_branch
      %13 = sbr.rel (0) target = $region5
    $region4: #{tpu_custom_call.1} parent=1 // pred_region
      %s15 = ssub.s32 16, 16
      %16 = vsyncadd [#allocation5], %s15
      %19 = dma.hbm_to_smem %s0, 16, [#allocation2], [#allocation5]
    $region5: #{tpu_custom_call.1} parent=1 // pred_fallthru
      _
    // Predicated region
    $region6: #{tpu_custom_call.1} parent=1 // pred_check
      _
    $region7: #{tpu_custom_call.1} parent=1 // pred_check_branch
      %21 = sbr.rel (0) target = $region9
    $region8: #{tpu_custom_call.1} parent=1 // pred_region
      %s23 = ssub.s32 64, 64
      %24 = vsyncadd [#allocation3], %s23
      %s26 = sshll.u32 [#allocation6], 4
      %s27 = int_to_ptr.vmem [resolvable:$true] %s26
      %29 = dma.hbm_to_vmem [thread:$0]  %s1, 64, %s27, [#allocation3]
    $region9: #{tpu_custom_call.1} parent=1 // pred_fallthru
      _
    // Predicated region
    $region10: #{tpu_custom_call.1} parent=1 // pred_check
      _
    $region11: #{tpu_custom_call.1} parent=1 // pred_check_branch
      %31 = sbr.rel (0) target = $region13
    $region12: #{tpu_custom_call.1} parent=1 // pred_region
      %s33 = ssub.s32 1024, 1024
      %34 = vsyncadd [#allocation8], %s33
      %s35 = sshll.u32 [#allocation7], 4
      %s36 = int_to_ptr.vmem [resolvable:$true] %s35
      %41 = dma.hbm_to_vmem [thread:$0]  %s2, 1024, %s36, [#allocation8], 128, 128, 8
    $region13: #{tpu_custom_call.1} parent=1 // pred_fallthru
      _
    // Predicated region
    $region14: #{tpu_custom_call.1} parent=1 // pred_check
      _
    $region15: #{tpu_custom_call.1} parent=1 // pred_check_branch
      %43 = sbr.rel (0) target = $region17
    $region16: #{tpu_custom_call.1} parent=1 // pred_region
      %44 = dma.done [#allocation5], 16
    $region17: #{tpu_custom_call.1} parent=1 // pred_fallthru
      _
    // Predicated region
    $region18: #{tpu_custom_call.1} parent=1 // pred_check
      _
    $region19: #{tpu_custom_call.1} parent=1 // pred_check_branch
      %46 = sbr.rel (0) target = $region21
    $region20: #{tpu_custom_call.1} parent=1 // pred_region
      %47 = dma.done [#allocation3], 64
    $region21: #{tpu_custom_call.1} parent=1 // pred_fallthru
      _
    // Predicated region
    $region22: #{tpu_custom_call.1} parent=1 // pred_check
      _
    $region23: #{tpu_custom_call.1} parent=1 // pred_check_branch
      %49 = sbr.rel (0) target = $region25
    $region24: #{tpu_custom_call.1} parent=1 // pred_region
      %50 = dma.done [#allocation8], 1024
    $region25: #{tpu_custom_call.1} parent=1 // pred_fallthru
      _
    %51 = sfence
    %v52 = vld [vmem:[#allocation6] sm:$0xf]
    %s53 = sld [smem:[#allocation2]]
    %v54 = vstv %s53
    %v55 = vsub.f32 %v52, %v54
    %s56 = sld [smem:[#allocation2 + $0x2]]
    %v57 = vstv %s56
    %v58 = vmul.f32 %v55, %v57
    %s59 = sld [smem:[#allocation2 + $0x1]]
    %v60 = vstv %s59
    %v61 = vsub.f32 %v52, %v60
    %s62 = sld [smem:[#allocation2 + $0x3]]
    %v63 = vstv %s62
    %v64 = vmul.f32 %v61, %v63
    %vm65 = vcmp.ge.f32.partialorder %v58, 1.0
    %s66 = sld [smem:[#allocation2 + $0x4]]
    %v67 = vstv %s66
    %vm68 = vcmp.lt.f32.partialorder %v58, %v67
    %vm69 = vmand %vm65, %vm68
    %vm70 = vcmp.ge.f32.partialorder %v64, 1.0
    %s71 = sld [smem:[#allocation2 + $0x5]]
    %v72 = vstv %s71
    %vm73 = vcmp.lt.f32.partialorder %v64, %v72
    %vm74 = vmand %vm70, %vm73
    %v75 = vsel %vm74, 1, 0
    %v76 = vrot.slane %v75, 7
    %v77 = vrot.slane %v76, 2
    %vm78 = vcmp.ne.s32.totalorder %v77, 0
    %vm79 = vmand %vm69, %vm78
    %v80 = vsel %vm79, %v58, 1.0
    %v82 = vrot.slane %v64, 7
    %v83 = vrot.slane %v82, 2
    %v85 = vsel %vm79, %v83, 1.0
    %v86 = vfloor.f32 %v80
    %v87 = vfloor.f32 %v85
    %v88 = vsub.f32 %v80, %v86
    %v89 = vsub.f32 %v85, %v87
    %v90 = vcvt.f32.s32.to.zero.pseudo %v86
    %v91 = vcvt.f32.s32.to.zero.pseudo %v87
    %v92 = vsub.f32 1.0, %v88
    %v93 = vmul.f32 %v92, %v92
    %v94 = vmul.f32 %v93, %v92
    %v95 = vsub.f32 %v88, 2.0
    %v96 = vmul.f32 %v95, 3.0
    %v97 = vmul.f32 %v88, %v88
    %v98 = vmul.f32 %v96, %v97
    %v99 = vadd.f32 %v98, 4.0
    %v100 = vmul.f32 %v93, 3.0
    %v101 = vadd.f32 %v88, 1.0
    %v102 = vmul.f32 %v100, %v101
    %v103 = vsub.f32 4.0, %v102
    %v104 = vmul.f32 %v97, %v88
    %v105 = vmul.f32 %v94, 0.16666667
    %v106 = vmul.f32 %v99, 0.16666667
    %v107 = vmul.f32 %v103, 0.16666667
    %v108 = vmul.f32 %v104, 0.16666667
    %v109 = vsub.f32 1.0, %v89
    %v110 = vmul.f32 %v109, %v109
    %v111 = vmul.f32 %v110, %v109
    %v112 = vsub.f32 %v89, 2.0
    %v113 = vmul.f32 %v112, 3.0
    %v114 = vmul.f32 %v89, %v89
    %v115 = vmul.f32 %v113, %v114
    %v116 = vadd.f32 %v115, 4.0
    %v117 = vmul.f32 %v110, 3.0
    %v118 = vadd.f32 %v89, 1.0
    %v119 = vmul.f32 %v117, %v118
    %v120 = vsub.f32 4.0, %v119
    %v121 = vmul.f32 %v114, %v89
    %v122 = vmul.f32 %v111, 0.16666667
    %v123 = vmul.f32 %v116, 0.16666667
    %v124 = vmul.f32 %v120, 0.16666667
    %v125 = vmul.f32 %v121, 0.16666667
    %v126 = vlaneseq
    %v127 = vshrl.u32 %v126, 7
    %v128 = vadd.s32 %v127, 8
    %v129 = vadd.s32 %v127, 16
    %v130 = vadd.s32 %v127, 24
    %v131 = vadd.s32 %v127, 32
    %v132 = vadd.s32 %v127, 40
    %v133 = vadd.s32 %v127, 48
    %v134 = vadd.s32 %v127, 56
    %v135 = vadd.s32 %v127, 64
    %v136 = vadd.s32 %v127, 72
    %v137 = vadd.s32 %v127, 80
    %v138 = vadd.s32 %v127, 88
    %v139 = vadd.s32 %v127, 96
    %v140 = vadd.s32 %v127, 104
    %v141 = vadd.s32 %v127, 112
    %v142 = vadd.s32 %v127, 120
    %v143 = vlaneseq
    %v144 = vshrl.u32 %v143, 7
    %v145 = vsub.s32 0, %v144
    %v146 = vrot.slane %v91, %v145
    %v147 = vlaneseq
    %v148 = vshrl.u32 %v147, 7
    %v149 = vsub.s32 2, %v148
    %v150 = vrot.slane %v91, %v149
    %v151 = vlaneseq
    %v152 = vshrl.u32 %v151, 7
    %v153 = vsub.s32 0, %v152
    %v154 = vrot.slane %v146, %v153
    %v155 = vlaneseq
    %v156 = vshrl.u32 %v155, 7
    %v157 = vsub.s32 0, %v156
    %v158 = vrot.slane %v150, %v157
    %v159 = vsub.s32 %v127, %v154
    %v160 = vsub.s32 %v127, %v158
    %v161 = vsub.s32 %v128, %v154
    %v162 = vsub.s32 %v128, %v158
    %v163 = vsub.s32 %v129, %v154
    %v164 = vsub.s32 %v129, %v158
    %v165 = vsub.s32 %v130, %v154
    %v166 = vsub.s32 %v130, %v158
    %v167 = vsub.s32 %v131, %v154
    %v168 = vsub.s32 %v131, %v158
    %v169 = vsub.s32 %v132, %v154
    %v170 = vsub.s32 %v132, %v158
    %v171 = vsub.s32 %v133, %v154
    %v172 = vsub.s32 %v133, %v158
    %v173 = vsub.s32 %v134, %v154
    %v174 = vsub.s32 %v134, %v158
    %v175 = vsub.s32 %v135, %v154
    %v176 = vsub.s32 %v135, %v158
    %v177 = vsub.s32 %v136, %v154
    %v178 = vsub.s32 %v136, %v158
    %v179 = vsub.s32 %v137, %v154
    %v180 = vsub.s32 %v137, %v158
    %v181 = vsub.s32 %v138, %v154
    %v182 = vsub.s32 %v138, %v158
    %v183 = vsub.s32 %v139, %v154
    %v184 = vsub.s32 %v139, %v158
    %v185 = vsub.s32 %v140, %v154
    %v186 = vsub.s32 %v140, %v158
    %v187 = vsub.s32 %v141, %v154
    %v188 = vsub.s32 %v141, %v158
    %v189 = vsub.s32 %v142, %v154
    %v190 = vsub.s32 %v142, %v158
    %vm191 = vcmp.eq.s32.totalorder %v159, 4294967295
    %vm192 = vcmp.eq.s32.totalorder %v160, 4294967295
    %vm193 = vcmp.eq.s32.totalorder %v161, 4294967295
    %vm194 = vcmp.eq.s32.totalorder %v162, 4294967295
    %vm195 = vcmp.eq.s32.totalorder %v163, 4294967295
    %vm196 = vcmp.eq.s32.totalorder %v164, 4294967295
    %vm197 = vcmp.eq.s32.totalorder %v165, 4294967295
    %vm198 = vcmp.eq.s32.totalorder %v166, 4294967295
    %vm199 = vcmp.eq.s32.totalorder %v167, 4294967295
    %vm200 = vcmp.eq.s32.totalorder %v168, 4294967295
    %vm201 = vcmp.eq.s32.totalorder %v169, 4294967295
    %vm202 = vcmp.eq.s32.totalorder %v170, 4294967295
    %vm203 = vcmp.eq.s32.totalorder %v171, 4294967295
    %vm204 = vcmp.eq.s32.totalorder %v172, 4294967295
    %vm205 = vcmp.eq.s32.totalorder %v173, 4294967295
    %vm206 = vcmp.eq.s32.totalorder %v174, 4294967295
    %vm207 = vcmp.eq.s32.totalorder %v175, 4294967295
    %vm208 = vcmp.eq.s32.totalorder %v176, 4294967295
    %vm209 = vcmp.eq.s32.totalorder %v177, 4294967295
    %vm210 = vcmp.eq.s32.totalorder %v178, 4294967295
    %vm211 = vcmp.eq.s32.totalorder %v179, 4294967295
    %vm212 = vcmp.eq.s32.totalorder %v180, 4294967295
    %vm213 = vcmp.eq.s32.totalorder %v181, 4294967295
    %vm214 = vcmp.eq.s32.totalorder %v182, 4294967295
    %vm215 = vcmp.eq.s32.totalorder %v183, 4294967295
    %vm216 = vcmp.eq.s32.totalorder %v184, 4294967295
    %vm217 = vcmp.eq.s32.totalorder %v185, 4294967295
    %vm218 = vcmp.eq.s32.totalorder %v186, 4294967295
    %vm219 = vcmp.eq.s32.totalorder %v187, 4294967295
    %vm220 = vcmp.eq.s32.totalorder %v188, 4294967295
    %vm221 = vcmp.eq.s32.totalorder %v189, 4294967295
    %vm222 = vcmp.eq.s32.totalorder %v190, 4294967295
    %vm223 = vcmp.eq.s32.totalorder %v159, 0
    %vm224 = vcmp.eq.s32.totalorder %v160, 0
    %vm225 = vcmp.eq.s32.totalorder %v161, 0
    %vm226 = vcmp.eq.s32.totalorder %v162, 0
    %vm227 = vcmp.eq.s32.totalorder %v163, 0
    %vm228 = vcmp.eq.s32.totalorder %v164, 0
    %vm229 = vcmp.eq.s32.totalorder %v165, 0
    %vm230 = vcmp.eq.s32.totalorder %v166, 0
    %vm231 = vcmp.eq.s32.totalorder %v167, 0
    %vm232 = vcmp.eq.s32.totalorder %v168, 0
    %vm233 = vcmp.eq.s32.totalorder %v169, 0
    %vm234 = vcmp.eq.s32.totalorder %v170, 0
    %vm235 = vcmp.eq.s32.totalorder %v171, 0
    %vm236 = vcmp.eq.s32.totalorder %v172, 0
    %vm237 = vcmp.eq.s32.totalorder %v173, 0
    %vm238 = vcmp.eq.s32.totalorder %v174, 0
    %vm239 = vcmp.eq.s32.totalorder %v175, 0
    %vm240 = vcmp.eq.s32.totalorder %v176, 0
    %vm241 = vcmp.eq.s32.totalorder %v177, 0
    %vm242 = vcmp.eq.s32.totalorder %v178, 0
    %vm243 = vcmp.eq.s32.totalorder %v179, 0
    %vm244 = vcmp.eq.s32.totalorder %v180, 0
    %vm245 = vcmp.eq.s32.totalorder %v181, 0
    %vm246 = vcmp.eq.s32.totalorder %v182, 0
    %vm247 = vcmp.eq.s32.totalorder %v183, 0
    %vm248 = vcmp.eq.s32.totalorder %v184, 0
    %vm249 = vcmp.eq.s32.totalorder %v185, 0
    %vm250 = vcmp.eq.s32.totalorder %v186, 0
    %vm251 = vcmp.eq.s32.totalorder %v187, 0
    %vm252 = vcmp.eq.s32.totalorder %v188, 0
    %vm253 = vcmp.eq.s32.totalorder %v189, 0
    %vm254 = vcmp.eq.s32.totalorder %v190, 0
    %vm255 = vcmp.eq.s32.totalorder %v159, 1
    %vm256 = vcmp.eq.s32.totalorder %v160, 1
    %vm257 = vcmp.eq.s32.totalorder %v161, 1
    %vm258 = vcmp.eq.s32.totalorder %v162, 1
    %vm259 = vcmp.eq.s32.totalorder %v163, 1
    %vm260 = vcmp.eq.s32.totalorder %v164, 1
    %vm261 = vcmp.eq.s32.totalorder %v165, 1
    %vm262 = vcmp.eq.s32.totalorder %v166, 1
    %vm263 = vcmp.eq.s32.totalorder %v167, 1
    %vm264 = vcmp.eq.s32.totalorder %v168, 1
    %vm265 = vcmp.eq.s32.totalorder %v169, 1
    %vm266 = vcmp.eq.s32.totalorder %v170, 1
    %vm267 = vcmp.eq.s32.totalorder %v171, 1
    %vm268 = vcmp.eq.s32.totalorder %v172, 1
    %vm269 = vcmp.eq.s32.totalorder %v173, 1
    %vm270 = vcmp.eq.s32.totalorder %v174, 1
    %vm271 = vcmp.eq.s32.totalorder %v175, 1
    %vm272 = vcmp.eq.s32.totalorder %v176, 1
    %vm273 = vcmp.eq.s32.totalorder %v177, 1
    %vm274 = vcmp.eq.s32.totalorder %v178, 1
    %vm275 = vcmp.eq.s32.totalorder %v179, 1
    %vm276 = vcmp.eq.s32.totalorder %v180, 1
    %vm277 = vcmp.eq.s32.totalorder %v181, 1
    %vm278 = vcmp.eq.s32.totalorder %v182, 1
    %vm279 = vcmp.eq.s32.totalorder %v183, 1
    %vm280 = vcmp.eq.s32.totalorder %v184, 1
    %vm281 = vcmp.eq.s32.totalorder %v185, 1
    %vm282 = vcmp.eq.s32.totalorder %v186, 1
    %vm283 = vcmp.eq.s32.totalorder %v187, 1
    %vm284 = vcmp.eq.s32.totalorder %v188, 1
    %vm285 = vcmp.eq.s32.totalorder %v189, 1
    %vm286 = vcmp.eq.s32.totalorder %v190, 1
    %vm287 = vcmp.eq.s32.totalorder %v159, 2
    %vm288 = vcmp.eq.s32.totalorder %v160, 2
    %vm289 = vcmp.eq.s32.totalorder %v161, 2
    %vm290 = vcmp.eq.s32.totalorder %v162, 2
    %vm291 = vcmp.eq.s32.totalorder %v163, 2
    %vm292 = vcmp.eq.s32.totalorder %v164, 2
    %vm293 = vcmp.eq.s32.totalorder %v165, 2
    %vm294 = vcmp.eq.s32.totalorder %v166, 2
    %vm295 = vcmp.eq.s32.totalorder %v167, 2
    %vm296 = vcmp.eq.s32.totalorder %v168, 2
    %vm297 = vcmp.eq.s32.totalorder %v169, 2
    %vm298 = vcmp.eq.s32.totalorder %v170, 2
    %vm299 = vcmp.eq.s32.totalorder %v171, 2
    %vm300 = vcmp.eq.s32.totalorder %v172, 2
    %vm301 = vcmp.eq.s32.totalorder %v173, 2
    %vm302 = vcmp.eq.s32.totalorder %v174, 2
    %vm303 = vcmp.eq.s32.totalorder %v175, 2
    %vm304 = vcmp.eq.s32.totalorder %v176, 2
    %vm305 = vcmp.eq.s32.totalorder %v177, 2
    %vm306 = vcmp.eq.s32.totalorder %v178, 2
    %vm307 = vcmp.eq.s32.totalorder %v179, 2
    %vm308 = vcmp.eq.s32.totalorder %v180, 2
    %vm309 = vcmp.eq.s32.totalorder %v181, 2
    %vm310 = vcmp.eq.s32.totalorder %v182, 2
    %vm311 = vcmp.eq.s32.totalorder %v183, 2
    %vm312 = vcmp.eq.s32.totalorder %v184, 2
    %vm313 = vcmp.eq.s32.totalorder %v185, 2
    %vm314 = vcmp.eq.s32.totalorder %v186, 2
    %vm315 = vcmp.eq.s32.totalorder %v187, 2
    %vm316 = vcmp.eq.s32.totalorder %v188, 2
    %vm317 = vcmp.eq.s32.totalorder %v189, 2
    %vm318 = vcmp.eq.s32.totalorder %v190, 2
    %v320 = vlaneseq
    %v321 = vshrl.u32 %v320, 7
    %v322 = vsub.s32 0, %v321
    %v323 = vrot.slane %v125, %v322
    %v324 = vlaneseq
    %v325 = vshrl.u32 %v324, 7
    %v326 = vsub.s32 2, %v325
    %v327 = vrot.slane %v125, %v326
    %v330 = vlaneseq
    %v331 = vshrl.u32 %v330, 7
    %v332 = vsub.s32 0, %v331
    %v333 = vrot.slane %v323, %v332
    %v334 = vlaneseq
    %v335 = vshrl.u32 %v334, 7
    %v336 = vsub.s32 0, %v335
    %v337 = vrot.slane %v327, %v336
    %v338 = vsel %vm287, %v333, 0.0
    %v339 = vsel %vm288, %v337, 0.0
    %v340 = vsel %vm289, %v333, 0.0
    %v341 = vsel %vm290, %v337, 0.0
    %v342 = vsel %vm291, %v333, 0.0
    %v343 = vsel %vm292, %v337, 0.0
    %v344 = vsel %vm293, %v333, 0.0
    %v345 = vsel %vm294, %v337, 0.0
    %v346 = vsel %vm295, %v333, 0.0
    %v347 = vsel %vm296, %v337, 0.0
    %v348 = vsel %vm297, %v333, 0.0
    %v349 = vsel %vm298, %v337, 0.0
    %v350 = vsel %vm299, %v333, 0.0
    %v351 = vsel %vm300, %v337, 0.0
    %v352 = vsel %vm301, %v333, 0.0
    %v353 = vsel %vm302, %v337, 0.0
    %v354 = vsel %vm303, %v333, 0.0
    %v355 = vsel %vm304, %v337, 0.0
    %v356 = vsel %vm305, %v333, 0.0
    %v357 = vsel %vm306, %v337, 0.0
    %v358 = vsel %vm307, %v333, 0.0
    %v359 = vsel %vm308, %v337, 0.0
    %v360 = vsel %vm309, %v333, 0.0
    %v361 = vsel %vm310, %v337, 0.0
    %v362 = vsel %vm311, %v333, 0.0
    %v363 = vsel %vm312, %v337, 0.0
    %v364 = vsel %vm313, %v333, 0.0
    %v365 = vsel %vm314, %v337, 0.0
    %v366 = vsel %vm315, %v333, 0.0
    %v367 = vsel %vm316, %v337, 0.0
    %v368 = vsel %vm317, %v333, 0.0
    %v369 = vsel %vm318, %v337, 0.0
    %v371 = vlaneseq
    %v372 = vshrl.u32 %v371, 7
    %v373 = vsub.s32 0, %v372
    %v374 = vrot.slane %v124, %v373
    %v375 = vlaneseq
    %v376 = vshrl.u32 %v375, 7
    %v377 = vsub.s32 2, %v376
    %v378 = vrot.slane %v124, %v377
    %v381 = vlaneseq
    %v382 = vshrl.u32 %v381, 7
    %v383 = vsub.s32 0, %v382
    %v384 = vrot.slane %v374, %v383
    %v385 = vlaneseq
    %v386 = vshrl.u32 %v385, 7
    %v387 = vsub.s32 0, %v386
    %v388 = vrot.slane %v378, %v387
    %v389 = vsel %vm255, %v384, %v338
    %v390 = vsel %vm256, %v388, %v339
    %v391 = vsel %vm257, %v384, %v340
    %v392 = vsel %vm258, %v388, %v341
    %v393 = vsel %vm259, %v384, %v342
    %v394 = vsel %vm260, %v388, %v343
    %v395 = vsel %vm261, %v384, %v344
    %v396 = vsel %vm262, %v388, %v345
    %v397 = vsel %vm263, %v384, %v346
    %v398 = vsel %vm264, %v388, %v347
    %v399 = vsel %vm265, %v384, %v348
    %v400 = vsel %vm266, %v388, %v349
    %v401 = vsel %vm267, %v384, %v350
    %v402 = vsel %vm268, %v388, %v351
    %v403 = vsel %vm269, %v384, %v352
    %v404 = vsel %vm270, %v388, %v353
    %v405 = vsel %vm271, %v384, %v354
    %v406 = vsel %vm272, %v388, %v355
    %v407 = vsel %vm273, %v384, %v356
    %v408 = vsel %vm274, %v388, %v357
    %v409 = vsel %vm275, %v384, %v358
    %v410 = vsel %vm276, %v388, %v359
    %v411 = vsel %vm277, %v384, %v360
    %v412 = vsel %vm278, %v388, %v361
    %v413 = vsel %vm279, %v384, %v362
    %v414 = vsel %vm280, %v388, %v363
    %v415 = vsel %vm281, %v384, %v364
    %v416 = vsel %vm282, %v388, %v365
    %v417 = vsel %vm283, %v384, %v366
    %v418 = vsel %vm284, %v388, %v367
    %v419 = vsel %vm285, %v384, %v368
    %v420 = vsel %vm286, %v388, %v369
    %v422 = vlaneseq
    %v423 = vshrl.u32 %v422, 7
    %v424 = vsub.s32 0, %v423
    %v425 = vrot.slane %v123, %v424
    %v426 = vlaneseq
    %v427 = vshrl.u32 %v426, 7
    %v428 = vsub.s32 2, %v427
    %v429 = vrot.slane %v123, %v428
    %v432 = vlaneseq
    %v433 = vshrl.u32 %v432, 7
    %v434 = vsub.s32 0, %v433
    %v435 = vrot.slane %v425, %v434
    %v436 = vlaneseq
    %v437 = vshrl.u32 %v436, 7
    %v438 = vsub.s32 0, %v437
    %v439 = vrot.slane %v429, %v438
    %v440 = vsel %vm223, %v435, %v389
    %v441 = vsel %vm224, %v439, %v390
    %v442 = vsel %vm225, %v435, %v391
    %v443 = vsel %vm226, %v439, %v392
    %v444 = vsel %vm227, %v435, %v393
    %v445 = vsel %vm228, %v439, %v394
    %v446 = vsel %vm229, %v435, %v395
    %v447 = vsel %vm230, %v439, %v396
    %v448 = vsel %vm231, %v435, %v397
    %v449 = vsel %vm232, %v439, %v398
    %v450 = vsel %vm233, %v435, %v399
    %v451 = vsel %vm234, %v439, %v400
    %v452 = vsel %vm235, %v435, %v401
    %v453 = vsel %vm236, %v439, %v402
    %v454 = vsel %vm237, %v435, %v403
    %v455 = vsel %vm238, %v439, %v404
    %v456 = vsel %vm239, %v435, %v405
    %v457 = vsel %vm240, %v439, %v406
    %v458 = vsel %vm241, %v435, %v407
    %v459 = vsel %vm242, %v439, %v408
    %v460 = vsel %vm243, %v435, %v409
    %v461 = vsel %vm244, %v439, %v410
    %v462 = vsel %vm245, %v435, %v411
    %v463 = vsel %vm246, %v439, %v412
    %v464 = vsel %vm247, %v435, %v413
    %v465 = vsel %vm248, %v439, %v414
    %v466 = vsel %vm249, %v435, %v415
    %v467 = vsel %vm250, %v439, %v416
    %v468 = vsel %vm251, %v435, %v417
    %v469 = vsel %vm252, %v439, %v418
    %v470 = vsel %vm253, %v435, %v419
    %v471 = vsel %vm254, %v439, %v420
    %v473 = vlaneseq
    %v474 = vshrl.u32 %v473, 7
    %v475 = vsub.s32 0, %v474
    %v476 = vrot.slane %v122, %v475
    %v477 = vlaneseq
    %v478 = vshrl.u32 %v477, 7
    %v479 = vsub.s32 2, %v478
    %v480 = vrot.slane %v122, %v479
    %v483 = vlaneseq
    %v484 = vshrl.u32 %v483, 7
    %v485 = vsub.s32 0, %v484
    %v486 = vrot.slane %v476, %v485
    %v487 = vlaneseq
    %v488 = vshrl.u32 %v487, 7
    %v489 = vsub.s32 0, %v488
    %v490 = vrot.slane %v480, %v489
    %v491 = vsel %vm191, %v486, %v440
    %v492 = vsel %vm192, %v490, %v441
    %v493 = vsel %vm193, %v486, %v442
    %v494 = vsel %vm194, %v490, %v443
    %v495 = vsel %vm195, %v486, %v444
    %v496 = vsel %vm196, %v490, %v445
    %v497 = vsel %vm197, %v486, %v446
    %v498 = vsel %vm198, %v490, %v447
    %v499 = vsel %vm199, %v486, %v448
    %v500 = vsel %vm200, %v490, %v449
    %v501 = vsel %vm201, %v486, %v450
    %v502 = vsel %vm202, %v490, %v451
    %v503 = vsel %vm203, %v486, %v452
    %v504 = vsel %vm204, %v490, %v453
    %v505 = vsel %vm205, %v486, %v454
    %v506 = vsel %vm206, %v490, %v455
    %v507 = vsel %vm207, %v486, %v456
    %v508 = vsel %vm208, %v490, %v457
    %v509 = vsel %vm209, %v486, %v458
    %v510 = vsel %vm210, %v490, %v459
    %v511 = vsel %vm211, %v486, %v460
    %v512 = vsel %vm212, %v490, %v461
    %v513 = vsel %vm213, %v486, %v462
    %v514 = vsel %vm214, %v490, %v463
    %v515 = vsel %vm215, %v486, %v464
    %v516 = vsel %vm216, %v490, %v465
    %v517 = vsel %vm217, %v486, %v466
    %v518 = vsel %vm218, %v490, %v467
    %v519 = vsel %vm219, %v486, %v468
    %v520 = vsel %vm220, %v490, %v469
    %v521 = vsel %vm221, %v486, %v470
    %v522 = vsel %vm222, %v490, %v471
    %v523 = vlaneseq
    %v524 = vshrl.u32 %v523, 7
    %v525 = vsub.s32 0, %v524
    %v526 = vrot.slane %v90, %v525
    %v527 = vlaneseq
    %v528 = vshrl.u32 %v527, 7
    %v529 = vsub.s32 2, %v528
    %v530 = vrot.slane %v90, %v529
    %v531 = vlaneseq
    %v532 = vshrl.u32 %v531, 7
    %v533 = vsub.s32 0, %v532
    %v534 = vrot.slane %v526, %v533
    %v535 = vlaneseq
    %v536 = vshrl.u32 %v535, 7
    %v537 = vsub.s32 0, %v536
    %v538 = vrot.slane %v530, %v537
    %v539 = vsub.s32 %v127, %v534
    %v540 = vsub.s32 %v127, %v538
    %v541 = vsub.s32 %v128, %v534
    %v542 = vsub.s32 %v128, %v538
    %vm543 = vcmp.eq.s32.totalorder %v539, 4294967295
    %vm544 = vcmp.eq.s32.totalorder %v540, 4294967295
    %vm545 = vcmp.eq.s32.totalorder %v541, 4294967295
    %vm546 = vcmp.eq.s32.totalorder %v542, 4294967295
    %vm547 = vcmp.eq.s32.totalorder %v539, 0
    %vm548 = vcmp.eq.s32.totalorder %v540, 0
    %vm549 = vcmp.eq.s32.totalorder %v541, 0
    %vm550 = vcmp.eq.s32.totalorder %v542, 0
    %vm551 = vcmp.eq.s32.totalorder %v539, 1
    %vm552 = vcmp.eq.s32.totalorder %v540, 1
    %vm553 = vcmp.eq.s32.totalorder %v541, 1
    %vm554 = vcmp.eq.s32.totalorder %v542, 1
    %vm555 = vcmp.eq.s32.totalorder %v539, 2
    %vm556 = vcmp.eq.s32.totalorder %v540, 2
    %vm557 = vcmp.eq.s32.totalorder %v541, 2
    %vm558 = vcmp.eq.s32.totalorder %v542, 2
    %v560 = vlaneseq
    %v561 = vshrl.u32 %v560, 7
    %v562 = vsub.s32 0, %v561
    %v563 = vrot.slane %v108, %v562
    %v564 = vlaneseq
    %v565 = vshrl.u32 %v564, 7
    %v566 = vsub.s32 2, %v565
    %v567 = vrot.slane %v108, %v566
    %v570 = vlaneseq
    %v571 = vshrl.u32 %v570, 7
    %v572 = vsub.s32 0, %v571
    %v573 = vrot.slane %v563, %v572
    %v574 = vlaneseq
    %v575 = vshrl.u32 %v574, 7
    %v576 = vsub.s32 0, %v575
    %v577 = vrot.slane %v567, %v576
    %v578 = vsel %vm555, %v573, 0.0
    %v579 = vsel %vm556, %v577, 0.0
    %v580 = vsel %vm557, %v573, 0.0
    %v581 = vsel %vm558, %v577, 0.0
    %v583 = vlaneseq
    %v584 = vshrl.u32 %v583, 7
    %v585 = vsub.s32 0, %v584
    %v586 = vrot.slane %v107, %v585
    %v587 = vlaneseq
    %v588 = vshrl.u32 %v587, 7
    %v589 = vsub.s32 2, %v588
    %v590 = vrot.slane %v107, %v589
    %v593 = vlaneseq
    %v594 = vshrl.u32 %v593, 7
    %v595 = vsub.s32 0, %v594
    %v596 = vrot.slane %v586, %v595
    %v597 = vlaneseq
    %v598 = vshrl.u32 %v597, 7
    %v599 = vsub.s32 0, %v598
    %v600 = vrot.slane %v590, %v599
    %v601 = vsel %vm551, %v596, %v578
    %v602 = vsel %vm552, %v600, %v579
    %v603 = vsel %vm553, %v596, %v580
    %v604 = vsel %vm554, %v600, %v581
    %v606 = vlaneseq
    %v607 = vshrl.u32 %v606, 7
    %v608 = vsub.s32 0, %v607
    %v609 = vrot.slane %v106, %v608
    %v610 = vlaneseq
    %v611 = vshrl.u32 %v610, 7
    %v612 = vsub.s32 2, %v611
    %v613 = vrot.slane %v106, %v612
    %v616 = vlaneseq
    %v617 = vshrl.u32 %v616, 7
    %v618 = vsub.s32 0, %v617
    %v619 = vrot.slane %v609, %v618
    %v620 = vlaneseq
    %v621 = vshrl.u32 %v620, 7
    %v622 = vsub.s32 0, %v621
    %v623 = vrot.slane %v613, %v622
    %v624 = vsel %vm547, %v619, %v601
    %v625 = vsel %vm548, %v623, %v602
    %v626 = vsel %vm549, %v619, %v603
    %v627 = vsel %vm550, %v623, %v604
    %v629 = vlaneseq
    %v630 = vshrl.u32 %v629, 7
    %v631 = vsub.s32 0, %v630
    %v632 = vrot.slane %v105, %v631
    %v633 = vlaneseq
    %v634 = vshrl.u32 %v633, 7
    %v635 = vsub.s32 2, %v634
    %v636 = vrot.slane %v105, %v635
    %v639 = vlaneseq
    %v640 = vshrl.u32 %v639, 7
    %v641 = vsub.s32 0, %v640
    %v642 = vrot.slane %v632, %v641
    %v643 = vlaneseq
    %v644 = vshrl.u32 %v643, 7
    %v645 = vsub.s32 0, %v644
    %v646 = vrot.slane %v636, %v645
    %v647 = vsel %vm543, %v642, %v624
    %v648 = vsel %vm544, %v646, %v625
    %v649 = vsel %vm545, %v642, %v626
    %v650 = vsel %vm546, %v646, %v627
    %v651 = vld [vmem:[#allocation7] sm:$0xff]
    %v652 = vld [vmem:[#allocation7 + $0x8] sm:$0xff]
    %v653 = vld [vmem:[#allocation7 + $0x10] sm:$0xff]
    %v654 = vld [vmem:[#allocation7 + $0x18] sm:$0xff]
    %v655 = vld [vmem:[#allocation7 + $0x20] sm:$0xff]
    %v656 = vld [vmem:[#allocation7 + $0x28] sm:$0xff]
    %v657 = vld [vmem:[#allocation7 + $0x30] sm:$0xff]
    %v658 = vld [vmem:[#allocation7 + $0x38] sm:$0xff]
    %659 = vmatprep.subr.mxu0 %v492
    %660 = vmatpush1.msra.mxu0 %v491
    %661 = vmatprep.subr.mxu0 %v494
    %662 = vmatpush1.msra.mxu0 %v493
    %663 = vmatprep.subr.mxu0 %v496
    %664 = vmatpush1.msra.mxu0 %v495
    %665 = vmatprep.subr.mxu0 %v498
    %666 = vmatpush1.msra.mxu0 %v497
    %667 = vmatprep.subr.mxu0 %v500
    %668 = vmatpush1.msra.mxu0 %v499
    %669 = vmatprep.subr.mxu0 %v502
    %670 = vmatpush1.msra.mxu0 %v501
    %671 = vmatprep.subr.mxu0 %v504
    %672 = vmatpush1.msra.mxu0 %v503
    %673 = vmatprep.subr.mxu0 %v506
    %674 = vmatpush1.msra.mxu0 %v505
    %675 = vmatprep.subr.mxu0 %v508
    %676 = vmatpush1.msra.mxu0 %v507
    %677 = vmatprep.subr.mxu0 %v510
    %678 = vmatpush1.msra.mxu0 %v509
    %679 = vmatprep.subr.mxu0 %v512
    %680 = vmatpush1.msra.mxu0 %v511
    %681 = vmatprep.subr.mxu0 %v514
    %682 = vmatpush1.msra.mxu0 %v513
    %683 = vmatprep.subr.mxu0 %v516
    %684 = vmatpush1.msra.mxu0 %v515
    %685 = vmatprep.subr.mxu0 %v518
    %686 = vmatpush1.msra.mxu0 %v517
    %687 = vmatprep.subr.mxu0 %v520
    %688 = vmatpush1.msra.mxu0 %v519
    %689 = vmatprep.subr.mxu0 %v522
    %690 = vmatpush1.msra.mxu0 %v521
    %691 = vmatprep.subr.mxu0 0.0
    %692 = vmatpush1.msra.mxu0 0.0
    %693 = vmatprep.subr.mxu0 0.0
    %694 = vmatpush1.msra.mxu0 0.0
    %695 = vmatprep.subr.mxu0 0.0
    %696 = vmatpush1.msra.mxu0 0.0
    %697 = vmatprep.subr.mxu0 0.0
    %698 = vmatpush1.msra.mxu0 0.0
    %699 = vmatprep.subr.mxu0 0.0
    %700 = vmatpush1.msra.mxu0 0.0
    %701 = vmatprep.subr.mxu0 0.0
    %702 = vmatpush1.msra.mxu0 0.0
    %703 = vmatprep.subr.mxu0 0.0
    %704 = vmatpush1.msra.mxu0 0.0
    %705 = vmatprep.subr.mxu0 0.0
    %706 = vmatpush1.msra.mxu0 0.0
    %707 = vmatprep.subr.mxu0 0.0
    %708 = vmatpush1.msra.mxu0 0.0
    %709 = vmatprep.subr.mxu0 0.0
    %710 = vmatpush1.msra.mxu0 0.0
    %711 = vmatprep.subr.mxu0 0.0
    %712 = vmatpush1.msra.mxu0 0.0
    %713 = vmatprep.subr.mxu0 0.0
    %714 = vmatpush1.msra.mxu0 0.0
    %715 = vmatprep.subr.mxu0 0.0
    %716 = vmatpush1.msra.mxu0 0.0
    %717 = vmatprep.subr.mxu0 0.0
    %718 = vmatpush1.msra.mxu0 0.0
    %719 = vmatprep.subr.mxu0 0.0
    %720 = vmatpush1.msra.mxu0 0.0
    %721 = vmatprep.subr.mxu0 0.0
    %722 = vmatpush1.msra.mxu0 0.0
    %723 = vmatprep.mubr.f32.mxu0 0.0
    %724 = vmatmul.mubr.f32.gmra.mrb[0].mxu0 %v651
    %v725 = vpop.f32.mrb[0].mxu0
    %v726 = vadd.f32 0.0, %v725
    %v727 = vpop.f32.mrb[0].mxu0
    %v728 = vadd.f32 0.0, %v727
    %729 = vmatprep.mubr.f32.mxu0 0.0
    %730 = vmatmul.mubr.f32.gmra.mrb[0].mxu0 %v652
    %v731 = vpop.f32.mrb[0].mxu0
    %v732 = vadd.f32 0.0, %v731
    %v733 = vpop.f32.mrb[0].mxu0
    %v734 = vadd.f32 0.0, %v733
    %735 = vmatprep.mubr.f32.mxu0 0.0
    %736 = vmatmul.mubr.f32.gmra.mrb[0].mxu0 %v653
    %v737 = vpop.f32.mrb[0].mxu0
    %v738 = vadd.f32 0.0, %v737
    %v739 = vpop.f32.mrb[0].mxu0
    %v740 = vadd.f32 0.0, %v739
    %741 = vmatprep.mubr.f32.mxu0 0.0
    %742 = vmatmul.mubr.f32.gmra.mrb[0].mxu0 %v654
    %v743 = vpop.f32.mrb[0].mxu0
    %v744 = vadd.f32 0.0, %v743
    %v745 = vpop.f32.mrb[0].mxu0
    %v746 = vadd.f32 0.0, %v745
    %747 = vmatprep.mubr.f32.mxu0 0.0
    %748 = vmatmul.mubr.f32.gmra.mrb[0].mxu0 %v655
    %v749 = vpop.f32.mrb[0].mxu0
    %v750 = vadd.f32 0.0, %v749
    %v751 = vpop.f32.mrb[0].mxu0
    %v752 = vadd.f32 0.0, %v751
    %753 = vmatprep.mubr.f32.mxu0 0.0
    %754 = vmatmul.mubr.f32.gmra.mrb[0].mxu0 %v656
    %v755 = vpop.f32.mrb[0].mxu0
    %v756 = vadd.f32 0.0, %v755
    %v757 = vpop.f32.mrb[0].mxu0
    %v758 = vadd.f32 0.0, %v757
    %759 = vmatprep.mubr.f32.mxu0 0.0
    %760 = vmatmul.mubr.f32.gmra.mrb[0].mxu0 %v657
    %v761 = vpop.f32.mrb[0].mxu0
    %v762 = vadd.f32 0.0, %v761
    %v763 = vpop.f32.mrb[0].mxu0
    %v764 = vadd.f32 0.0, %v763
    %765 = vmatprep.mubr.f32.mxu0 0.0
    %766 = vmatmul.mubr.f32.gmra.mrb[0].mxu0 %v658
    %v767 = vpop.f32.mrb[0].mxu0
    %v768 = vadd.f32 0.0, %v767
    %v769 = vpop.f32.mrb[0].mxu0
    %v770 = vadd.f32 0.0, %v769
    %771 = vdwg.mxu0
    %v772 = vmul.f32 %v726, %v647
    %v773 = vmul.f32 %v728, %v648
    %v774 = vmul.f32 %v732, %v649
    %v775 = vmul.f32 %v734, %v650
    %v776 = vmul.f32 %v738, %v647
    %v777 = vmul.f32 %v740, %v648
    %v778 = vmul.f32 %v744, %v649
    %v779 = vmul.f32 %v746, %v650
    %v780 = vmul.f32 %v750, %v647
    %v781 = vmul.f32 %v752, %v648
    %v782 = vmul.f32 %v756, %v649
    %v783 = vmul.f32 %v758, %v650
    %v784 = vmul.f32 %v762, %v647
    %v785 = vmul.f32 %v764, %v648
    %v786 = vmul.f32 %v768, %v649
    %v787 = vmul.f32 %v770, %v650
    %v788 = vadd.f32 %v772, %v774
    %v789 = vrot.slane %v788, 4
    %v790 = vadd.f32 %v788, %v789
    %v791 = vrot.slane %v790, 2
    %v792 = vadd.f32 %v790, %v791
    %v793 = vrot.slane %v792, 1
    %v794 = vadd.f32 %v792, %v793
    %v795 = vadd.f32 %v773, %v775
    %v796 = vrot.slane %v795, 4
    %v797 = vadd.f32 %v795, %v796
    %v798 = vrot.slane %v797, 2
    %v799 = vadd.f32 %v797, %v798
    %v800 = vrot.slane %v799, 1
    %v801 = vadd.f32 %v799, %v800
    %v802 = vadd.f32 %v776, %v778
    %v803 = vrot.slane %v802, 4
    %v804 = vadd.f32 %v802, %v803
    %v805 = vrot.slane %v804, 2
    %v806 = vadd.f32 %v804, %v805
    %v807 = vrot.slane %v806, 1
    %v808 = vadd.f32 %v806, %v807
    %v809 = vadd.f32 %v777, %v779
    %v810 = vrot.slane %v809, 4
    %v811 = vadd.f32 %v809, %v810
    %v812 = vrot.slane %v811, 2
    %v813 = vadd.f32 %v811, %v812
    %v814 = vrot.slane %v813, 1
    %v815 = vadd.f32 %v813, %v814
    %v816 = vadd.f32 %v780, %v782
    %v817 = vrot.slane %v816, 4
    %v818 = vadd.f32 %v816, %v817
    %v819 = vrot.slane %v818, 2
    %v820 = vadd.f32 %v818, %v819
    %v821 = vrot.slane %v820, 1
    %v822 = vadd.f32 %v820, %v821
    %v823 = vadd.f32 %v781, %v783
    %v824 = vrot.slane %v823, 4
    %v825 = vadd.f32 %v823, %v824
    %v826 = vrot.slane %v825, 2
    %v827 = vadd.f32 %v825, %v826
    %v828 = vrot.slane %v827, 1
    %v829 = vadd.f32 %v827, %v828
    %v830 = vadd.f32 %v784, %v786
    %v831 = vrot.slane %v830, 4
    %v832 = vadd.f32 %v830, %v831
    %v833 = vrot.slane %v832, 2
    %v834 = vadd.f32 %v832, %v833
    %v835 = vrot.slane %v834, 1
    %v836 = vadd.f32 %v834, %v835
    %v837 = vadd.f32 %v785, %v787
    %v838 = vrot.slane %v837, 4
    %v839 = vadd.f32 %v837, %v838
    %v840 = vrot.slane %v839, 2
    %v841 = vadd.f32 %v839, %v840
    %v842 = vrot.slane %v841, 1
    %v843 = vadd.f32 %v841, %v842
    %v844 = vsel %vm79, 1, 0
    %v845 = vlaneseq
    %v846 = vshrl.u32 %v845, 7
    %v847 = vsub.s32 0, %v846
    %v848 = vrot.slane %v844, %v847
    %v849 = vlaneseq
    %v850 = vshrl.u32 %v849, 7
    %v851 = vsub.s32 2, %v850
    %v852 = vrot.slane %v844, %v851
    %v853 = vlaneseq
    %v854 = vshrl.u32 %v853, 7
    %v855 = vsub.s32 0, %v854
    %v856 = vrot.slane %v848, %v855
    %v857 = vlaneseq
    %v858 = vshrl.u32 %v857, 7
    %v859 = vsub.s32 0, %v858
    %v860 = vrot.slane %v852, %v859
    %vm861 = vcmp.eq.s32.totalorder %v856, 1
    %vm862 = vcmp.eq.s32.totalorder %v860, 1
    %vm871 = vcmask 1041409
    %v872 = vsel %vm871, %v808, %v794
    %vm873 = vcmask 1042434
    %v874 = vsel %vm873, %v822, %v872
    %vm875 = vcmask 1043459
    %v876 = vsel %vm875, %v836, %v874
    %v877 = vsel %vm871, %v815, %v801
    %v878 = vsel %vm873, %v829, %v877
    %v879 = vsel %vm875, %v843, %v878
    %v882 = vsel %vm861, %v876, 0.0
    %v883 = vsel %vm862, %v879, 0.0
    %v886 = vcombine.low %v882, %v883
    %888 = vst [vmem:[#allocation9] sm:$0xff] %v886
    // Predicated region
    $region26: #{tpu_custom_call.1} parent=1 // pred_check
      _
    $region27: #{tpu_custom_call.1} parent=1 // pred_check_branch
      %890 = sbr.rel (0) target = $region29
    $region28: #{tpu_custom_call.1} parent=1 // pred_region
      %s892 = ssub.s32 128, 128
      %893 = vsyncadd [#allocation4], %s892
      %s895 = sshll.u32 [#allocation9], 4
      %s896 = int_to_ptr.vmem [resolvable:$true] %s895
      %898 = dma.vmem_to_hbm [thread:$0]  %s896, 128, %s3, [#allocation4]
    $region29: #{tpu_custom_call.1} parent=1 // pred_fallthru
      _
    // Predicated region
    $region30: #{tpu_custom_call.1} parent=1 // pred_check
      _
    $region31: #{tpu_custom_call.1} parent=1 // pred_check_branch
      %900 = sbr.rel (0) target = $region33
    $region32: #{tpu_custom_call.1} parent=1 // pred_region
      %901 = dma.done [#allocation4], 128
    $region33: #{tpu_custom_call.1} parent=1 // pred_fallthru
      _
    %902 = vsyncpa [#allocation3], 1
    %903 = vsyncpa [#allocation8], 1
    %904 = vsyncpa [#allocation4], 1
    %905 = vsyncpa [#allocation5], 1

</llo_original>
